<compile_context>
chip_gen: v7x
topology: tpu7x:2x2x1
jax: 0.10.0
libtpu: 0.0.40
codegen_flags: <defaults>
</compile_context>

<pallas_src>
import functools

import jax
import jax.numpy as jnp
import numpy as np
from jax.experimental import pallas as pl
from jax.experimental.pallas import tpu as pltpu

_TM = 128  # row tile for the batched (grid) path


def _use_bf16_weights() -> bool:
    """bf16 operator on v6e/v7x-class chips; pure f32 on v5e and older."""
    try:
        kind = jax.devices()[0].device_kind.lower()
    except Exception:  # pragma: no cover - conservative fallback
        return False
    return not any(tag in kind for tag in ("v2", "v3", "v4", "v5"))


def _convt_tanh_kernel(x_ref, w_ref, o_ref):
    # x_ref: (tm, Kp)   flattened (zero-padded) NCHW input rows
    # w_ref: (Kp, Cp)   dense transposed-conv operator (prep-time padded/cast)
    # o_ref: (tm, Cp)   lane-dense (multiple of 128) flattened output
    x = x_ref[...].astype(w_ref.dtype)  # bf16 MXU path on v6e/v7x; no-op on f32
    y = jnp.dot(x, w_ref[...], preferred_element_type=jnp.float32)
    o_ref[...] = jnp.tanh(y).astype(o_ref.dtype)  # tanh on EUP, in f32


def prepare_convt_operator(w_pt, H, W):
    """Static weight prep: run ONCE at module-init time, not in the hot path.

    w_pt: PyTorch ConvTranspose2d weight, shape (Cin, Cout, K, K).
    Returns M_pad of shape (ceil8(Cin*H*W), ceil128(Cout*Ho*Wo)) whose top-left
    (Cin*H*W, Cout*Ho*Wo) block satisfies
        M[ci*H*W + ih*W + iw, co*Ho*Wo + (ih+kh)*Wo + (iw+kw)] = w_pt[ci, co, kh, kw]
    i.e. exactly ConvTranspose2d(stride=1, padding=0, dilation=1, groups=1,
    bias=False) on an HxW input with NCHW row-major flattening on both sides.
    Extra rows/cols are zero (rows: padded input columns are zero; cols: sliced
    off by the wrapper), so padding never changes the result.
    """
    w_np = np.asarray(jax.device_get(w_pt), dtype=np.float32)
    Cin, Cout, K, _ = w_np.shape
    Ho, Wo = H + K - 1, W + K - 1
    M = np.zeros((Cin, H, W, Cout, Ho, Wo), np.float32)
    for ih in range(H):
        for iw in range(W):
            # y[co, ih+kh, iw+kw] += x[ci, ih, iw] * w[ci, co, kh, kw]
            M[:, ih, iw, :, ih:ih + K, iw:iw + K] = w_np
    M = M.reshape(Cin * H * W, Cout * Ho * Wo)

    rows = -(-M.shape[0] // 8) * 8          # 45 -> 48  (sublane multiple)
    cols = -(-M.shape[1] // 128) * 128      # 160 -> 256 (lane multiple)
    Mp = np.zeros((rows, cols), np.float32)
    Mp[:M.shape[0], :M.shape[1]] = M

    dtype = jnp.bfloat16 if _use_bf16_weights() else jnp.float32
    return jnp.asarray(Mp, dtype=dtype)


@functools.partial(jax.jit, static_argnums=(2, 3, 4))
def conv_transpose_tanh(x_nchw, w_mat, Cout, Ho, Wo):
    """x_nchw: (N, Cin, H, W); w_mat: prep-time padded operator (Kp, Cp)."""
    N = x_nchw.shape[0]
    Kp, Cp = w_mat.shape
    n_out = Cout * Ho * Wo

    # Row-major flatten of NCHW (free), then zero-pad the contraction dim to Kp.
    x2d = x_nchw.reshape(N, -1)
    if x2d.shape[1] != Kp:
        x2d = jnp.pad(x2d, ((0, 0), (0, Kp - x2d.shape[1])))

    cost = pl.CostEstimate(
        flops=2 * N * Kp * Cp,
        transcendentals=N * Cp,
        bytes_accessed=(x2d.size * x2d.dtype.itemsize
                        + w_mat.size * w_mat.dtype.itemsize
                        + N * Cp * x_nchw.dtype.itemsize),
    )

    if N <= _TM:
        # Grid-less: whole working set (< ~64 KiB) sits in VMEM; no pipelining
        # machinery for a single tiny step.  This is the module's N=1 path.
        y2d = pl.pallas_call(
            _convt_tanh_kernel,
            out_shape=jax.ShapeDtypeStruct((N, Cp), x_nchw.dtype),
            in_specs=[
                pl.BlockSpec(memory_space=pltpu.MemorySpace.VMEM),
                pl.BlockSpec(memory_space=pltpu.MemorySpace.VMEM),
            ],
            out_specs=pl.BlockSpec(memory_space=pltpu.MemorySpace.VMEM),
            cost_estimate=cost,
        )(x2d, w_mat)
    else:
        # Batched path: amortize launch/DMA cost across many rows.  Weight
        # index_map returns (0, 0) -> stays VMEM-resident across the grid;
        # batch axis is "parallel" so v7x can shard it across its 2 TensorCores.
        Np = pl.cdiv(N, _TM) * _TM
        if Np != N:
            x2d = jnp.pad(x2d, ((0, Np - N), (0, 0)))
        y2d = pl.pallas_call(
            _convt_tanh_kernel,
            out_shape=jax.ShapeDtypeStruct((Np, Cp), x_nchw.dtype),
            grid=(Np // _TM,),
            in_specs=[
                pl.BlockSpec((_TM, Kp), lambda i: (i, 0)),
                pl.BlockSpec((Kp, Cp), lambda i: (0, 0)),
            ],
            out_specs=pl.BlockSpec((_TM, Cp), lambda i: (i, 0)),
            compiler_params=pltpu.CompilerParams(
                dimension_semantics=("parallel",)),
            cost_estimate=cost,
        )(x2d, w_mat)
        y2d = y2d[:N]

    # First n_out columns are ordered (co, oh, ow) -> this IS the NCHW output.
    return y2d[:, :n_out].reshape(N, Cout, Ho, Wo)


def _reference(x_nchw, w_pt):
    # Independent scatter-add formulation of ConvTranspose2d (stride=1, no bias) + tanh.
    N, Cin, H, W = x_nchw.shape
    _, Cout, K, _ = w_pt.shape
    y = jnp.zeros((N, Cout, H + K - 1, W + K - 1), jnp.float32)
    for kh in range(K):
        for kw in range(K):
            contrib = jnp.einsum('nihw,io->nohw', x_nchw, w_pt[:, :, kh, kw])
            y = y.at[:, :, kh:kh + H, kw:kw + W].add(contrib)
    return jnp.tanh(y)


if __name__ == "__main__":
    key = jax.random.PRNGKey(0)
    kx, kw, kb = jax.random.split(key, 3)

    # Shapes implied by the module: x1 = (1, 5, 3, 3); ConvTranspose2d(5, 10, 2).
    N, Cin, H, W = 1, 5, 3, 3
    Cout, K = 10, 2
    Ho, Wo = H + K - 1, W + K - 1

    x1 = jax.random.normal(kx, (N, Cin, H, W), dtype=jnp.float32)
    # Deterministic synthetic weight in PyTorch ConvTranspose2d layout (Cin, Cout, kH, kW).
    w = jax.random.normal(kw, (Cin, Cout, K, K), dtype=jnp.float32) * 0.1

    # One-time, hot-path-hoisted weight preparation (the "module init").
    w_mat = prepare_convt_operator(w, H, W)
    # bf16 operator (v6e/v7x) trades ~1e-3 absolute error for halved weight DMA
    # and native-MXU passes; f32 path (v5e) stays bit-tight vs the reference.
    tol = 2e-2 if w_mat.dtype == jnp.bfloat16 else 2e-5

    # --- module-shaped test (N = 1, grid-less path) ---
    out = conv_transpose_tanh(x1, w_mat, Cout, Ho, Wo)
    out = jax.block_until_ready(out)
    ref = _reference(x1, w)
    assert out.shape == (N, Cout, Ho, Wo), out.shape
    assert jnp.allclose(out, ref, atol=tol, rtol=tol), "mismatch vs reference (N=1)"

    # --- batched test (exercises the row-grid / parallel path) ---
    NB = 256
    xb = jax.random.normal(kb, (NB, Cin, H, W), dtype=jnp.float32)
    outb = jax.block_until_ready(conv_transpose_tanh(xb, w_mat, Cout, Ho, Wo))
    refb = _reference(xb, w)
    assert outb.shape == (NB, Cout, Ho, Wo), outb.shape
    assert jnp.allclose(outb, refb, atol=tol, rtol=tol), "mismatch vs reference (batched)"

    print("KERNEL_OK")
</pallas_src>

<mosaic_0001>
module attributes {stable_mosaic.version = 11 : i64} {
  func.func @_convt_tanh_kernel(%arg0: memref<1x48xf32, #tpu.memory_space<vmem>>, %arg1: memref<48x256xbf16, #tpu.memory_space<vmem>>, %arg2: memref<1x256xf32, #tpu.memory_space<vmem>>) attributes {dimension_semantics = [], scalar_prefetch = 0 : i64, scratch_operands = 0 : i64, tpu.core_type = #tpu.core_type<tc>} {
    %c0 = arith.constant 0 : index
    %c0_0 = arith.constant 0 : index
    %0 = vector.load %arg0[%c0, %c0_0] : memref<1x48xf32, #tpu.memory_space<vmem>>, vector<1x48xf32>
    %1 = arith.truncf %0 : vector<1x48xf32> to vector<1x48xbf16>
    %c0_1 = arith.constant 0 : index
    %c0_2 = arith.constant 0 : index
    %2 = vector.load %arg1[%c0_1, %c0_2] : memref<48x256xbf16, #tpu.memory_space<vmem>>, vector<48x256xbf16>
    %cst = arith.constant dense<0.000000e+00> : vector<1x256xf32>
    %3 = tpu.matmul %1, %2, %cst {dimension_numbers = #tpu.dot_dimension_numbers<[1], [0], [0], [1], [0, 0, 1, 1], [], []>} : vector<1x48xbf16>, vector<48x256xbf16>, vector<1x256xf32> -> vector<1x256xf32>
    %4 = math.tanh %3 : vector<1x256xf32>
    %c0_3 = arith.constant 0 : index
    %c0_4 = arith.constant 0 : index
    %5 = vector.load %arg2[%c0_3, %c0_4] : memref<1x256xf32, #tpu.memory_space<vmem>>, vector<1x256xf32>
    tpu.vector_store %arg2[%c0_3, %c0_4], %4 {strides = array<i32>} : memref<1x256xf32, #tpu.memory_space<vmem>>, vector<1x256xf32>,
    return
  }
}

</mosaic_0001>

<llo_original>
// kernel: conv_transpose_tanh.1
$region0: #{conv_transpose_tanh.1}
  #allocation0 [shape = 'u32[]', space=smem, size = 0x4, offset = 0x4, fixed_abs, tag = 'smem constant byte address 0x4 - core index']
  #allocation1 [shape = 'u32[144,128]{1,0:T(1,128)}', space=vmem, size = 0x12000, scoped, tag = 'internal scratch']
  %s0 = inlined_call_operand.vmem [shape: f32[1,48], index: 0, kind: input, shape index: {}]
  %s1 = inlined_call_operand.vmem [shape: bf16[48,256], index: 1, kind: input, shape index: {}]
  %s2 = inlined_call_operand.vmem [shape: f32[1,256], index: 2, kind: output, shape index: {}]
  %s3 = sld [smem:[#allocation0]]
  $region18: #{conv_transpose_tanh.1} parent=0
    _
  %s5 = ssub.s32 1, %s3
  %s6 = scalar_select 0, %s5, %s3
  // Predicated region
  $region2: #{conv_transpose_tanh.1} parent=0 // pred_check
    _
  $region3: #{conv_transpose_tanh.1} parent=0 // pred_check_branch
    %8 = sbr.rel (0) target = $region5
  $region4: #{conv_transpose_tanh.1} parent=0 // pred_region
    _
  $region5: #{conv_transpose_tanh.1} parent=0 // pred_fallthru
    _
  // Predicated region
  $region6: #{conv_transpose_tanh.1} parent=0 // pred_check
    _
  $region7: #{conv_transpose_tanh.1} parent=0 // pred_check_branch
    %10 = sbr.rel (0) target = $region9
  $region8: #{conv_transpose_tanh.1} parent=0 // pred_region
    _
  $region9: #{conv_transpose_tanh.1} parent=0 // pred_fallthru
    _
  %v12 = vld [vmem:[%s0] sm:$0x1]
  %v13 = vpack.c.bf16 %v12, %v12
  %v14 = vld [vmem:[%s1] sm:$0xff]
  %v15 = vld [vmem:[%s1 + $0x8] sm:$0xff]
  %v16 = vld [vmem:[%s1 + $0x10] sm:$0xff]
  %v17 = vld [vmem:[%s1 + $0x18] sm:$0xff]
  %v18 = vld [vmem:[%s1 + $0x20] sm:$0xff]
  %v19 = vld [vmem:[%s1 + $0x28] sm:$0xff]
  %v26 = vunpack.c.l.b16 %v14
  %v27 = vunpack.c.h.b16 %v14
  %v28 = vunpack.c.l.b16 %v15
  %v29 = vunpack.c.h.b16 %v15
  %v30 = vunpack.c.l.b16 %v16
  %v31 = vunpack.c.h.b16 %v16
  %v32 = vunpack.c.l.b16 %v17
  %v33 = vunpack.c.h.b16 %v17
  %v34 = vunpack.c.l.b16 %v18
  %v35 = vunpack.c.h.b16 %v18
  %v36 = vunpack.c.l.b16 %v19
  %v37 = vunpack.c.h.b16 %v19
  %v38 = vpack.c.b16 %v28, %v26
  %v39 = vpack.c.b16 %v29, %v27
  %v40 = vpack.c.b16 %v32, %v30
  %v41 = vpack.c.b16 %v33, %v31
  %v42 = vpack.c.b16 %v36, %v34
  %v43 = vpack.c.b16 %v37, %v35
  %vm50 = vcmask 392192
  %v52 = vsel %vm50, %v13, 0
  %54 = vmatprep.subr.bf16.mxu0 %v39
  %55 = vmatpush1.bf16.msra.mxu0 %v38
  %56 = vmatprep.subr.bf16.mxu0 %v41
  %57 = vmatpush1.bf16.msra.mxu0 %v40
  %58 = vmatprep.subr.bf16.mxu0 %v43
  %59 = vmatpush1.bf16.msra.mxu0 %v42
  %60 = vmatprep.subr.bf16.mxu0 0
  %61 = vmatpush1.bf16.msra.mxu0 0
  %62 = vmatprep.subr.bf16.mxu0 0
  %63 = vmatpush1.bf16.msra.mxu0 0
  %64 = vmatprep.subr.bf16.mxu0 0
  %65 = vmatpush1.bf16.msra.mxu0 0
  %66 = vmatprep.subr.bf16.mxu0 0
  %67 = vmatpush1.bf16.msra.mxu0 0
  %68 = vmatprep.subr.bf16.mxu0 0
  %69 = vmatpush1.bf16.msra.mxu0 0
  %70 = vmatprep.subr.bf16.mxu0 0
  %71 = vmatpush1.bf16.msra.mxu0 0
  %72 = vmatprep.subr.bf16.mxu0 0
  %73 = vmatpush1.bf16.msra.mxu0 0
  %74 = vmatprep.subr.bf16.mxu0 0
  %75 = vmatpush1.bf16.msra.mxu0 0
  %76 = vmatprep.subr.bf16.mxu0 0
  %77 = vmatpush1.bf16.msra.mxu0 0
  %78 = vmatprep.subr.bf16.mxu0 0
  %79 = vmatpush1.bf16.msra.mxu0 0
  %80 = vmatprep.subr.bf16.mxu0 0
  %81 = vmatpush1.bf16.msra.mxu0 0
  %82 = vmatprep.subr.bf16.mxu0 0
  %83 = vmatpush1.bf16.msra.mxu0 0
  %84 = vmatprep.subr.bf16.mxu0 0
  %85 = vmatpush1.bf16.msra.mxu0 0
  %86 = vmatprep.mubr.bf16.mxu0 0
  %87 = vmatmul.mubr.bf16.gmra.mrb[0].mxu0 %v52
  %v88 = vpop.f32.mrb[0].mxu0
  %v89 = vadd.f32 0.0, %v88
  %v90 = vpop.f32.mrb[0].mxu0
  %v91 = vadd.f32 0.0, %v90
  %v92 = vpop.f32.mrb[0].mxu0
  %v93 = vpop.f32.mrb[0].mxu0
  %94 = vdwg.mxu0
  %v95 = vtanh.pop %v89
  %v96 = vtanh.pop %v91
  %v99 = vcombine.low %v95, %v96
  %v101 = vunpack.c.l.s4 1966171168
  %v102 = vunpack.c.0.s8 %v101
  %v103 = vlaneseq
  %v104 = vshrl.u32 %v103, 7
  %v105 = vsub.s32 %v102, %v104
  %v106 = vrot.slane %v99, %v105
  %v108 = vunpack.c.l.s4 1966171168
  %v109 = vunpack.c.0.s8 %v108
  %v110 = vlaneseq
  %v111 = vshrl.u32 %v110, 7
  %v112 = vsub.s32 %v109, %v111
  %v113 = vrot.slane %v106, %v112
  %v115 = vlaneseq
  %vm116 = vcmp.ge.s32.totalorder %v115, 0
  %vm117 = vcmp.lt.s32.totalorder %v115, 256
  %vm118 = vmand %vm116, %vm117
  %119 = vst.msk [vmem:[%s2] sm:$0x3] %vm118, %v113
  // Predicated region
  $region10: #{conv_transpose_tanh.1} parent=0 // pred_check
    _
  $region11: #{conv_transpose_tanh.1} parent=0 // pred_check_branch
    %121 = sbr.rel (0) target = $region13
  $region12: #{conv_transpose_tanh.1} parent=0 // pred_region
    _
  $region13: #{conv_transpose_tanh.1} parent=0 // pred_fallthru
    _
  // Predicated region
  $region14: #{conv_transpose_tanh.1} parent=0 // pred_check
    _
  $region15: #{conv_transpose_tanh.1} parent=0 // pred_check_branch
    %123 = sbr.rel (0) target = $region17
  $region16: #{conv_transpose_tanh.1} parent=0 // pred_region
    _
  $region17: #{conv_transpose_tanh.1} parent=0 // pred_fallthru
    _

</llo_original>
